<compile_context>
chip_gen: v7x
topology: tpu7x:2x2x1
jax: 0.10.0
libtpu: 0.0.40
codegen_flags: <defaults>
</compile_context>

<pallas_src>
import functools

import jax
import jax.numpy as jnp
from jax.experimental import pallas as pl
from jax.experimental.pallas import tpu as pltpu

LANES = 128
DEFAULT_TILE_ROWS = 2048   # 2048*128*4 B = 1 MiB per f32 block
NUM_CORES = 2              # leading 'parallel' grid axis; 2x on v7x, harmless on 1-TC chips


def _cdiv(a, b):
    return -(-a // b)


def _round_up(a, b):
    return _cdiv(a, b) * b


def _row_align(dtype):
    # Minimum sublane multiple for a (rows, 128) block of this dtype.
    return {4: 8, 2: 16, 1: 32}.get(jnp.dtype(dtype).itemsize, 8)


def _focal_loss_kernel(logits_ref, targets_ref, out_ref, *,
                       gamma, w_neg, w_pos, tile_rows, sub,
                       tiles_per_core, total_grid_tiles,
                       full_tiles, has_partial, local_full_rows, rem):
    c = pl.program_id(0)
    i = pl.program_id(1)
    t_idx = c * tiles_per_core + i

    # Per-core accumulator lives in the resident output block (index depends
    # only on c), reset at the start of each core's chunk.
    @pl.when(i == 0)
    def _():
        out_ref[...] = jnp.zeros_like(out_ref)

    def tile_loss():
        x = logits_ref[...].astype(jnp.float32)
        t = targets_ref[...].astype(jnp.float32)
        # Stable BCE-with-logits sharing one exp:
        #   e = exp(-|x|);  ce = max(x,0) - x*t + log1p(e)
        #   sigmoid(x) = 1/(1+e) (x>=0)  or  e/(1+e) (x<0)
        e = jnp.exp(-jnp.abs(x))
        ce = jnp.maximum(x, 0.0) - x * t + jnp.log1p(e)
        inv = 1.0 / (1.0 + e)   # exact divide kept (approx recip breaks rtol=2e-5)
        p = jnp.where(x >= 0.0, inv, e * inv)
        # 1 - p_t == t + p*(1 - 2t)  (fewer VALU ops than building p_t first)
        one_m_pt = t + p * (1.0 - 2.0 * t)
        # (1 - p_t) ** gamma via repeated multiply for small integer gamma.
        g = float(gamma)
        if g == int(g) and 0 <= int(g) <= 8:
            gi = int(g)
            if gi == 0:
                mod = jnp.ones_like(one_m_pt)
            else:
                mod = one_m_pt
                for _ in range(gi - 1):
                    mod = mod * one_m_pt
        else:
            mod = one_m_pt ** g
        # alpha_t and the class weight folded into one per-class weight.
        w = w_neg + (w_pos - w_neg) * t
        return w * mod * ce

    def reduce_tile(loss):
        # Lane-dense per-tile partial; VPU adds only (no per-tile XLU) when
        # tile_rows % 8 == 0.
        if sub == 8:
            return loss.reshape(tile_rows // 8, 8, LANES).sum(axis=0)
        return jnp.sum(loss, axis=0, keepdims=True)

    def accum_full():
        out_ref[...] += reduce_tile(tile_loss())

    def accum_masked():
        loss = tile_loss()
        # Row-level comparison (no flat int32 index -> no overflow for huge N).
        row = jax.lax.broadcasted_iota(jnp.int32, (tile_rows, LANES), 0)
        if rem > 0:
            lane = jax.lax.broadcasted_iota(jnp.int32, (tile_rows, LANES), 1)
            valid = (row < local_full_rows) | ((row == local_full_rows) & (lane < rem))
        else:
            valid = row < local_full_rows
        out_ref[...] += reduce_tile(jnp.where(valid, loss, 0.0))

    if full_tiles == total_grid_tiles:
        # Every grid tile is fully valid: unconditional unmasked fast path.
        accum_full()
    else:
        if full_tiles > 0:
            pl.when(t_idx < full_tiles)(accum_full)
        if has_partial:
            if total_grid_tiles == 1:
                accum_masked()
            else:
                pl.when(t_idx == full_tiles)(accum_masked)
        # Tiles past the partial tile (only from rounding the grid up to
        # NUM_CORES * tiles_per_core) contribute nothing.


def focal_loss_with_class_weight(logits, targets, *, alpha=0.25, gamma=2.0,
                                 class_weight=None, reduction="mean",
                                 tile_rows_max=DEFAULT_TILE_ROWS):
    """Pallas TPU forward of FocalLossWithClassWeight.

    logits, targets: 1-D arrays of shape [N], streamed in their original
    dtypes (no wrapper casts).  Keep N % 128 == 0 upstream to make the
    (N,) -> (N//128, 128) reshape free (otherwise one minimal pad copy is
    made).  Targets may be float32 / bfloat16 / int8 / bool.
    """
    assert reduction in ("mean", "sum"), \
        "only reduction='mean'/'sum' are implemented in-kernel"
    # TODO(synk): reduction='none' (per-element [N] output) not implemented in-kernel.

    n = int(logits.shape[0])
    assert n > 0 and targets.shape == logits.shape

    rows = _cdiv(n, LANES)
    pad = rows * LANES - n
    if pad:  # only when N % 128 != 0; pass aligned N to avoid this copy
        logits = jnp.pad(logits, (0, pad))
        targets = jnp.pad(targets, (0, pad))
    logits2 = logits.reshape(rows, LANES)
    targets2 = targets.reshape(rows, LANES)

    align = max(_row_align(logits2.dtype), _row_align(targets2.dtype))

    if rows <= tile_rows_max:
        tile_rows = rows                 # block == full array dims (always legal)
    else:
        num_tiles = _cdiv(rows, tile_rows_max)
        tile_rows = _round_up(_cdiv(rows, num_tiles), align)
        if tile_rows >= rows:
            tile_rows = rows
    live_tiles = _cdiv(rows, tile_rows)

    ncores = NUM_CORES if live_tiles >= NUM_CORES else 1
    tiles_per_core = _cdiv(live_tiles, ncores)
    total_grid_tiles = ncores * tiles_per_core

    full_valid_rows = n // LANES
    rem = n % LANES
    full_tiles = full_valid_rows // tile_rows       # fully-valid tiles
    has_partial = live_tiles > full_tiles           # at most one partial tile
    local_full_rows = full_valid_rows - full_tiles * tile_rows

    sub = 8 if tile_rows % 8 == 0 else 1            # partial-accumulator rows

    if class_weight is None:
        cw_neg = cw_pos = 1.0
    else:
        cw_neg, cw_pos = float(class_weight[0]), float(class_weight[1])
    w_pos = float(alpha) * cw_pos
    w_neg = (1.0 - float(alpha)) * cw_neg

    kernel = functools.partial(
        _focal_loss_kernel,
        gamma=float(gamma), w_neg=w_neg, w_pos=w_pos,
        tile_rows=tile_rows, sub=sub,
        tiles_per_core=tiles_per_core, total_grid_tiles=total_grid_tiles,
        full_tiles=full_tiles, has_partial=has_partial,
        local_full_rows=local_full_rows, rem=rem)

    def in_map(c, i):
        t = c * tiles_per_core + i
        if total_grid_tiles > live_tiles:   # clamp grid-rounding (dead) tiles
            t = jnp.minimum(t, live_tiles - 1)
        return (t, 0)

    partials = pl.pallas_call(
        kernel,
        out_shape=jax.ShapeDtypeStruct((ncores * sub, LANES), jnp.float32),
        grid=(ncores, tiles_per_core),
        in_specs=[pl.BlockSpec((tile_rows, LANES), in_map),
                  pl.BlockSpec((tile_rows, LANES), in_map)],
        out_specs=pl.BlockSpec((sub, LANES), lambda c, i: (c, 0)),
        compiler_params=pltpu.CompilerParams(
            dimension_semantics=("parallel", "arbitrary")),
    )(logits2, targets2)

    total = jnp.sum(partials)                      # tiny (<=2*8*128) XLA reduce
    if reduction == "mean":
        return total / jnp.float32(n)
    return total


def _reference_jax(logits, targets, alpha, gamma, class_weight, reduction="mean"):
    x = logits.astype(jnp.float32)
    t = targets.astype(jnp.float32)
    ce = jnp.maximum(x, 0.0) - x * t + jnp.log1p(jnp.exp(-jnp.abs(x)))
    p = jax.nn.sigmoid(x)
    p_t = p * t + (1 - p) * (1 - t)
    alpha_t = alpha * t + (1 - alpha) * (1 - t)
    loss = alpha_t * (1 - p_t) ** gamma * ce
    w_t = class_weight[1] * t + class_weight[0] * (1 - t)
    loss = loss * w_t
    return jnp.mean(loss) if reduction == "mean" else jnp.sum(loss)


if __name__ == "__main__":
    key = jax.random.PRNGKey(0)
    k1, k2, k3, k4 = jax.random.split(key, 4)
    class_weight = jnp.array([0.3, 0.7], dtype=jnp.float32)

    # Test 1: small N, not a multiple of 128 (masked single-block path).
    N = 200
    logits = jax.random.normal(k1, (N,), dtype=jnp.float32) * 2.0
    targets = (jax.random.uniform(k2, (N,)) > 0.5).astype(jnp.float32)
    out = focal_loss_with_class_weight(logits, targets, alpha=0.25, gamma=2.0,
                                       class_weight=class_weight, reduction="mean")
    out = jax.block_until_ready(out)
    ref = _reference_jax(logits, targets, 0.25, 2.0, class_weight, "mean")
    assert jnp.allclose(out, ref, rtol=2e-5, atol=1e-6), (out, ref)

    # Test 2: multi-tile grid + 2-way parallel core split + grid-rounding dead tile.
    N2 = 3000
    logits_b = jax.random.normal(k3, (N2,), dtype=jnp.float32) * 2.0
    targets_b = (jax.random.uniform(k4, (N2,)) > 0.5).astype(jnp.float32)
    out2 = focal_loss_with_class_weight(logits_b, targets_b, alpha=0.25, gamma=2.0,
                                        class_weight=class_weight, reduction="mean",
                                        tile_rows_max=8)
    out2 = jax.block_until_ready(out2)
    ref2 = _reference_jax(logits_b, targets_b, 0.25, 2.0, class_weight, "mean")
    assert jnp.allclose(out2, ref2, rtol=2e-5, atol=1e-6), (out2, ref2)

    # Test 3: bf16 targets streamed natively + ragged (OOB-padded) last block.
    out3 = focal_loss_with_class_weight(
        logits_b, targets_b.astype(jnp.bfloat16), alpha=0.25, gamma=2.0,
        class_weight=class_weight, reduction="mean", tile_rows_max=16)
    out3 = jax.block_until_ready(out3)
    assert jnp.allclose(out3, ref2, rtol=2e-5, atol=1e-6), (out3, ref2)

    # Test 4: N % 128 == 0 (no pad copy), all-full fast path, no class weight, 'sum'.
    N3 = 1024
    k5, k6 = jax.random.split(k4)
    logits_c = jax.random.normal(k5, (N3,), dtype=jnp.float32) * 2.0
    targets_c = (jax.random.uniform(k6, (N3,)) > 0.5).astype(jnp.float32)
    out4 = focal_loss_with_class_weight(logits_c, targets_c, alpha=0.25, gamma=2.0,
                                        class_weight=None, reduction="sum")
    out4 = jax.block_until_ready(out4)
    ref4 = _reference_jax(logits_c, targets_c, 0.25, 2.0,
                          jnp.array([1.0, 1.0], jnp.float32), "sum")
    assert jnp.allclose(out4, ref4, rtol=2e-5, atol=1e-3), (out4, ref4)

    print("KERNEL_OK")
</pallas_src>

<mosaic_0001>
module attributes {stable_mosaic.version = 11 : i64} {
  func.func @_focal_loss_kernel(%arg0: i32, %arg1: i32, %arg2: memref<2x128xf32, #tpu.memory_space<vmem>>, %arg3: memref<2x128xf32, #tpu.memory_space<vmem>>, %arg4: memref<1x128xf32, #tpu.memory_space<vmem>>) attributes {dimension_semantics = [#tpu.dimension_semantics<parallel>, #tpu.dimension_semantics<arbitrary>], iteration_bounds = array<i64: 1, 1>, scalar_prefetch = 0 : i64, scratch_operands = 0 : i64, tpu.core_type = #tpu.core_type<tc>, window_params = [{transform_indices = @transform_0, window_bounds = array<i64: 2, 128>}, {transform_indices = @transform_1, window_bounds = array<i64: 2, 128>}, {transform_indices = @transform_2, window_bounds = array<i64: 1, 128>}]} {
    %c0_i32 = arith.constant 0 : i32
    %0 = arith.cmpi eq, %arg1, %c0_i32 : i32
    %1 = arith.extui %0 : i1 to i32
    %c0_i32_0 = arith.constant 0 : i32
    %2 = arith.cmpi ne, %1, %c0_i32_0 : i32
    scf.if %2 {
      %cst_19 = arith.constant 0.000000e+00 : f32
      %53 = vector.broadcast %cst_19 : f32 to vector<1x128xf32>
      %c0_20 = arith.constant 0 : index
      %c0_21 = arith.constant 0 : index
      %54 = vector.load %arg4[%c0_20, %c0_21] : memref<1x128xf32, #tpu.memory_space<vmem>>, vector<1x128xf32>
      tpu.vector_store %arg4[%c0_20, %c0_21], %53 {strides = array<i32>} : memref<1x128xf32, #tpu.memory_space<vmem>>, vector<1x128xf32>,
    } else {
    }
    %c0 = arith.constant 0 : index
    %c0_1 = arith.constant 0 : index
    %3 = vector.load %arg2[%c0, %c0_1] : memref<2x128xf32, #tpu.memory_space<vmem>>, vector<2x128xf32>
    %c0_2 = arith.constant 0 : index
    %c0_3 = arith.constant 0 : index
    %4 = vector.load %arg3[%c0_2, %c0_3] : memref<2x128xf32, #tpu.memory_space<vmem>>, vector<2x128xf32>
    %5 = math.absf %3 : vector<2x128xf32>
    %cst = arith.constant 0.000000e+00 : f32
    %6 = vector.broadcast %cst : f32 to vector<2x128xf32>
    %7 = arith.subf %6, %5 : vector<2x128xf32>
    %8 = math.exp %7 : vector<2x128xf32>
    %cst_4 = arith.constant 0.000000e+00 : f32
    %9 = vector.broadcast %cst_4 : f32 to vector<2x128xf32>
    %10 = arith.maximumf %3, %9 : vector<2x128xf32>
    %11 = arith.mulf %3, %4 : vector<2x128xf32>
    %12 = arith.subf %10, %11 : vector<2x128xf32>
    %13 = math.log1p %8 : vector<2x128xf32>
    %14 = arith.addf %12, %13 : vector<2x128xf32>
    %cst_5 = arith.constant 1.000000e+00 : f32
    %15 = vector.broadcast %cst_5 : f32 to vector<2x128xf32>
    %16 = arith.addf %15, %8 : vector<2x128xf32>
    %cst_6 = arith.constant 1.000000e+00 : f32
    %17 = vector.broadcast %cst_6 : f32 to vector<2x128xf32>
    %18 = arith.divf %17, %16 : vector<2x128xf32>
    %cst_7 = arith.constant 0.000000e+00 : f32
    %19 = vector.broadcast %cst_7 : f32 to vector<2x128xf32>
    %20 = arith.cmpf oge, %3, %19 : vector<2x128xf32>
    %21 = arith.mulf %8, %18 : vector<2x128xf32>
    %22 = arith.select %20, %18, %21 : vector<2x128xi1>, vector<2x128xf32>
    %cst_8 = arith.constant 2.000000e+00 : f32
    %23 = vector.broadcast %cst_8 : f32 to vector<2x128xf32>
    %24 = arith.mulf %23, %4 : vector<2x128xf32>
    %cst_9 = arith.constant 1.000000e+00 : f32
    %25 = vector.broadcast %cst_9 : f32 to vector<2x128xf32>
    %26 = arith.subf %25, %24 : vector<2x128xf32>
    %27 = arith.mulf %22, %26 : vector<2x128xf32>
    %28 = arith.addf %4, %27 : vector<2x128xf32>
    %29 = arith.mulf %28, %28 : vector<2x128xf32>
    %cst_10 = arith.constant -0.0500000119 : f32
    %30 = vector.broadcast %cst_10 : f32 to vector<2x128xf32>
    %31 = arith.mulf %30, %4 : vector<2x128xf32>
    %cst_11 = arith.constant 0.225000009 : f32
    %32 = vector.broadcast %cst_11 : f32 to vector<2x128xf32>
    %33 = arith.addf %32, %31 : vector<2x128xf32>
    %34 = arith.mulf %33, %29 : vector<2x128xf32>
    %35 = arith.mulf %34, %14 : vector<2x128xf32>
    %36 = tpu.iota {dimensions = array<i32: 0>} : vector<2x128xi32>
    %37 = tpu.iota {dimensions = array<i32: 1>} : vector<2x128xi32>
    %c1_i32 = arith.constant 1 : i32
    %38 = vector.broadcast %c1_i32 : i32 to vector<2x128xi32>
    %39 = arith.cmpi slt, %36, %38 : vector<2x128xi32>
    %c1_i32_12 = arith.constant 1 : i32
    %40 = vector.broadcast %c1_i32_12 : i32 to vector<2x128xi32>
    %41 = arith.cmpi eq, %36, %40 : vector<2x128xi32>
    %c72_i32 = arith.constant 72 : i32
    %42 = vector.broadcast %c72_i32 : i32 to vector<2x128xi32>
    %43 = arith.cmpi slt, %37, %42 : vector<2x128xi32>
    %44 = arith.andi %41, %43 : vector<2x128xi1>
    %45 = arith.ori %39, %44 : vector<2x128xi1>
    %c0_13 = arith.constant 0 : index
    %c0_14 = arith.constant 0 : index
    %46 = vector.load %arg4[%c0_13, %c0_14] : memref<1x128xf32, #tpu.memory_space<vmem>>, vector<1x128xf32>
    %cst_15 = arith.constant 0.000000e+00 : f32
    %47 = vector.broadcast %cst_15 : f32 to vector<2x128xf32>
    %48 = arith.select %45, %35, %47 : vector<2x128xi1>, vector<2x128xf32>
    %cst_16 = arith.constant dense<0.000000e+00> : vector<128xf32>
    %49 = vector.multi_reduction <add>, %48, %cst_16 [0] : vector<2x128xf32> to vector<128xf32>
    %50 = vector.shape_cast %49 : vector<128xf32> to vector<1x128xf32>
    %51 = arith.addf %46, %50 : vector<1x128xf32>
    %c0_17 = arith.constant 0 : index
    %c0_18 = arith.constant 0 : index
    %52 = vector.load %arg4[%c0_17, %c0_18] : memref<1x128xf32, #tpu.memory_space<vmem>>, vector<1x128xf32>
    tpu.vector_store %arg4[%c0_17, %c0_18], %51 {strides = array<i32>} : memref<1x128xf32, #tpu.memory_space<vmem>>, vector<1x128xf32>,
    return
  }
  func.func @transform_0(%arg0: i32, %arg1: i32) -> (i32, i32) {
    %c1_i32 = arith.constant 1 : i32
    %0 = arith.muli %arg0, %c1_i32 : i32
    %1 = arith.addi %0, %arg1 : i32
    %c0_i32 = arith.constant 0 : i32
    %c0_i32_0 = arith.constant 0 : i32
    return %1, %c0_i32 : i32, i32
  }
  func.func @transform_1(%arg0: i32, %arg1: i32) -> (i32, i32) {
    %c1_i32 = arith.constant 1 : i32
    %0 = arith.muli %arg0, %c1_i32 : i32
    %1 = arith.addi %0, %arg1 : i32
    %c0_i32 = arith.constant 0 : i32
    %c0_i32_0 = arith.constant 0 : i32
    return %1, %c0_i32 : i32, i32
  }
  func.func @transform_2(%arg0: i32, %arg1: i32) -> (i32, i32) {
    %c0_i32 = arith.constant 0 : i32
    %c0_i32_0 = arith.constant 0 : i32
    return %arg0, %c0_i32 : i32, i32
  }
}

</mosaic_0001>

<llo_original>
// kernel: tpu_custom_call.1
$region0: #{tpu_custom_call.1}
  #allocation0 [shape = 'u32[]', space=smem, size = 0x4, offset = 0x4, fixed_abs, tag = 'smem constant byte address 0x4 - core index']
  #allocation1 [shape = 'u32[144,128]{1,0:T(1,128)}', space=vmem, size = 0x12000, scoped, tag = 'internal scratch']
  %s0 = inlined_call_operand.hbm [shape: f32[2,128], index: 0, kind: input, shape index: {}]
  %s1 = inlined_call_operand.vmem [shape: f32[2,128], index: 1, kind: input, shape index: {}]
  %s2 = inlined_call_operand.hbm [shape: f32[1,128], index: 2, kind: output, shape index: {}]
  %s3 = sld [smem:[#allocation0]]
  $region26: #{tpu_custom_call.1} parent=0
    _
  %s5 = ssub.s32 1, %s3
  %s6 = scalar_select 0, %s5, %s3
  $region1: #{tpu_custom_call.1} parent=0
    #allocation2 [shape = 'u8[1024]{0}', space=vmem, size = 0x400, scoped, tag = 'input window, operand 0, single buffered']
    #allocation3 [shape = 's32[1]{0}', space=sflag, size = 0x4, scoped, tag = 'scoped memory for tpu_custom_call.1']
    #allocation4 [shape = 's32[1]{0}', space=sflag, size = 0x4, scoped, tag = 'scoped memory for tpu_custom_call.1']
    #allocation5 [shape = 'u8[512]{0}', space=vmem, size = 0x400, scoped, tag = 'output window, operand 0, single buffered']
    %7 = vsyncpa [#allocation3], 0
    %8 = vsyncpa [#allocation4], 0
    // Predicated region
    $region2: #{tpu_custom_call.1} parent=1 // pred_check
      _
    $region3: #{tpu_custom_call.1} parent=1 // pred_check_branch
      %10 = sbr.rel (0) target = $region5
    $region4: #{tpu_custom_call.1} parent=1 // pred_region
      %s11 = sadd.s32 0, 0
      %s13 = ssub.s32 32, 32
      %14 = vsyncadd [#allocation3], %s13
      %s15 = smul.addr %s11, 32
      %s16 = scalar_lea.hbm %s0, %s15
      %s18 = sshll.u32 [#allocation2], 4
      %s19 = int_to_ptr.vmem [resolvable:$true] %s18
      %21 = dma.hbm_to_vmem [thread:$0]  %s16, 32, %s19, [#allocation3]
    $region5: #{tpu_custom_call.1} parent=1 // pred_fallthru
      _
    // Predicated region
    $region6: #{tpu_custom_call.1} parent=1 // pred_check
      _
    $region7: #{tpu_custom_call.1} parent=1 // pred_check_branch
      %23 = sbr.rel (0) target = $region9
    $region8: #{tpu_custom_call.1} parent=1 // pred_region
      %s24 = sadd.s32 0, 0
      %p25 = scmp.lt.s32.totalorder %s24, 0
      %s26 = scalar_select %p25, %s24, 0
      %s27 = smul.addr %s26, 2
      %s28 = scalar_lea.vmem %s1, %s27
      %s29 = sadd.s32 0, 0
    $region9: #{tpu_custom_call.1} parent=1 // pred_fallthru
      _
    // Predicated region
    $region10: #{tpu_custom_call.1} parent=1 // pred_check
      _
    $region11: #{tpu_custom_call.1} parent=1 // pred_check_branch
      %31 = sbr.rel (0) target = $region13
    $region12: #{tpu_custom_call.1} parent=1 // pred_region
      %32 = dma.done [#allocation3], 32
    $region13: #{tpu_custom_call.1} parent=1 // pred_fallthru
      _
    %s33 = sadd.s32 0, 0
    %p34 = scmp.lt.s32.totalorder %s33, 0
    %s35 = scalar_select %p34, %s33, 0
    %s36 = smul.addr %s35, 2
    %s37 = scalar_lea.vmem %s1, %s36
    %s38 = sadd.s32 0, 0
    %s39 = sadd.s32 0, 0
    %p40 = scmp.lt.s32.totalorder %s39, 0
    %s41 = scalar_select %p40, %s39, 0
    %s42 = smul.addr %s41, 2
    %s43 = scalar_lea.vmem %s1, %s42
    %s44 = sadd.s32 0, 0
    %p45 = scmp.eq.s32.totalorder 0, 0
    // Predicated region
    $region14: #{tpu_custom_call.1} parent=1 // pred_check
      %p46 = pneg %p45
    $region15: #{tpu_custom_call.1} parent=1 // pred_check_branch
      %48 = sbr.rel (%p46) target = $region17
    $region16: #{tpu_custom_call.1} parent=1 // pred_region
      %49 = vst [vmem:[#allocation5] sm:$0x1] 0.0
    $region17: #{tpu_custom_call.1} parent=1 // pred_fallthru
      _
    %v50 = vld [vmem:[#allocation2] sm:$0x3]
    %v51 = vld [vmem:[%s43] sm:$0x3]
    %v52 = vand.u32 2147483647, %v50
    %v53 = vsub.f32 0.0, %v52
    %v54 = vmul.f32 %v53, 1.442695
    %v55 = vpow.pop %v54
    %v56 = vmax.f32 %v50, 0.0
    %v57 = vmul.f32 %v50, %v51
    %v58 = vsub.f32 %v56, %v57
    %v59 = vadd.f32 %v55, 1.0
    %v60 = vlog2.pop %v59
    %v61 = vmul.f32 %v60, 0.6931472
    %v62 = vmul.f32 -0.5, %v55
    %v63 = vadd.f32 %v62, 1.0
    %v64 = vmul.f32 %v63, %v55
    %v65 = vand.u32 2147483647, %v55
    %vm66 = vcmp.lt.f32.partialorder %v65, 0.0004427343
    %v67 = vsel %vm66, %v64, %v61
    %v68 = vadd.f32 %v58, %v67
    %v69 = vadd.f32 %v55, 1.0
    %v70 = vrcp.pop %v69
    %v71 = vmul.f32 1.0, %v70
    %vm72 = vcmp.ge.f32.partialorder %v50, 0.0
    %v73 = vmul.f32 %v55, %v71
    %v74 = vsel %vm72, %v71, %v73
    %v75 = vmul.f32 %v51, 2.0
    %v76 = vsub.f32 1.0, %v75
    %v77 = vmul.f32 %v74, %v76
    %v78 = vadd.f32 %v51, %v77
    %v79 = vmul.f32 %v78, %v78
    %v80 = vmul.f32 %v51, -0.050000012
    %v81 = vadd.f32 %v80, 0.22500001
    %v82 = vmul.f32 %v81, %v79
    %v83 = vmul.f32 %v82, %v68
    %v84 = vlaneseq
    %v85 = vshrl.u32 %v84, 7
    %v86 = vlaneseq
    %v87 = vand.u32 %v86, 127
    %vm88 = vcmp.lt.s32.totalorder %v85, 1
    %vm89 = vcmp.eq.s32.totalorder %v85, 1
    %vm90 = vcmp.lt.s32.totalorder %v87, 72
    %vm91 = vmand %vm89, %vm90
    %vm92 = vmor %vm88, %vm91
    %v93 = vld [vmem:[#allocation5] sm:$0x1]
    %v94 = vsel %vm92, %v83, 0.0
    %vm95 = vcmask 1041408
    %v96 = vsel %vm95, %v94, 0.0
    %v97 = vrot.slane %v96, 4
    %v98 = vadd.f32 %v96, %v97
    %v99 = vrot.slane %v98, 2
    %v100 = vadd.f32 %v98, %v99
    %v101 = vrot.slane %v100, 1
    %v102 = vadd.f32 %v100, %v101
    %v103 = vadd.f32 %v93, %v102
    %104 = vst [vmem:[#allocation5] sm:$0x1] %v103
    // Predicated region
    $region18: #{tpu_custom_call.1} parent=1 // pred_check
      _
    $region19: #{tpu_custom_call.1} parent=1 // pred_check_branch
      %106 = sbr.rel (0) target = $region21
    $region20: #{tpu_custom_call.1} parent=1 // pred_region
      %s108 = ssub.s32 16, 16
      %109 = vsyncadd [#allocation4], %s108
      %s111 = sshll.u32 [#allocation5], 4
      %s112 = int_to_ptr.vmem [resolvable:$true] %s111
      %114 = dma.vmem_to_hbm [thread:$0]  %s112, 16, %s2, [#allocation4]
    $region21: #{tpu_custom_call.1} parent=1 // pred_fallthru
      _
    // Predicated region
    $region22: #{tpu_custom_call.1} parent=1 // pred_check
      _
    $region23: #{tpu_custom_call.1} parent=1 // pred_check_branch
      %116 = sbr.rel (0) target = $region25
    $region24: #{tpu_custom_call.1} parent=1 // pred_region
      %117 = dma.done [#allocation4], 16
    $region25: #{tpu_custom_call.1} parent=1 // pred_fallthru
      _
    %118 = vsyncpa [#allocation3], 1
    %119 = vsyncpa [#allocation4], 1

</llo_original>
